<compile_context>
chip_gen: v5e
topology: v5e:2x2
jax: 0.10.0
libtpu: 0.0.40
codegen_flags: <defaults>
</compile_context>

<pallas_src>
import jax
import jax.numpy as jnp
from jax.experimental import pallas as pl
from jax.experimental.pallas import tpu as pltpu


LANES = 512                    # lane-dense: large multiple of 128
TARGET_TILE_BYTES = 4 << 20    # ~4 MiB per buffer (dtype-independent byte budget)
VMEM_LIMIT_BYTES = 32 << 20    # 2 in + 2 out buffers (~16 MiB) + headroom;
                               # > v5e's 16 MiB default, < v7x's 64 MiB physical


def _relu_kernel(x_ref, o_ref):
    # Elementwise max(x, 0) on the whole VMEM tile (VPU path).
    o_ref[...] = jnp.maximum(x_ref[...], jnp.zeros((), x_ref.dtype))


def _relu_2d(x2d):
    """ReLU on an exactly (rows, LANES)-shaped 2-D slab via pallas_call."""
    rows, lanes = x2d.shape
    dtype = x2d.dtype
    itemsize = jnp.dtype(dtype).itemsize

    # Byte-targeted tile rows, rounded down to a multiple of 32 (covers
    # f32 / bf16 / int8 sublane packing for the (8,128) block constraint).
    tile_r_target = max(32, (TARGET_TILE_BYTES // (lanes * itemsize)) // 32 * 32)
    if rows <= tile_r_target:
        tile_r = rows              # single block == full dim (always legal)
    else:
        tile_r = tile_r_target     # multiple of 32 -> divisible by 8

    grid = (pl.cdiv(rows, tile_r),)  # last block may be partial; writes masked

    cost = pl.CostEstimate(
        flops=rows * lanes,
        transcendentals=0,
        bytes_accessed=2 * rows * lanes * itemsize,
    )

    return pl.pallas_call(
        _relu_kernel,
        out_shape=jax.ShapeDtypeStruct((rows, lanes), dtype),
        grid_spec=pl.GridSpec(
            grid=grid,
            in_specs=[pl.BlockSpec((tile_r, lanes), lambda i: (i, 0))],
            out_specs=pl.BlockSpec((tile_r, lanes), lambda i: (i, 0)),
        ),
        compiler_params=pltpu.CompilerParams(
            # Row tiles are independent -> shard across TensorCores on v7x.
            dimension_semantics=("parallel",),
            vmem_limit_bytes=VMEM_LIMIT_BYTES,
        ),
        cost_estimate=cost,
    )(x2d)


def relu_pallas(x):
    """Apply ReLU with a tiled, lane-dense Pallas TPU kernel.

    Accepts any shape / numeric dtype; semantics identical to F.relu(x).
    """
    orig_shape = x.shape
    n = x.size
    if n == 0:
        return x

    flat = x.reshape(-1)
    zero = jnp.zeros((), x.dtype)
    bulk = (n // LANES) * LANES

    if bulk == n:
        # Exactly lane-divisible: free reshape in, free reshape out.
        out2d = _relu_2d(flat.reshape(n // LANES, LANES))
        return out2d.reshape(orig_shape)

    if bulk == 0:
        # Fewer than LANES elements: a kernel launch isn't worth it.
        return jnp.maximum(x, zero)

    # Ragged tail: kernel on the lane-aligned bulk, tiny jnp path for the
    # (<LANES)-element tail.  Avoids padding + re-slicing the whole tensor.
    bulk_out = _relu_2d(flat[:bulk].reshape(bulk // LANES, LANES)).reshape(-1)
    tail_out = jnp.maximum(flat[bulk:], zero)
    return jnp.concatenate([bulk_out, tail_out]).reshape(orig_shape)


if __name__ == "__main__":
    key = jax.random.PRNGKey(0)

    # Small NCHW input consistent with the module's forward (F.relu(x)).
    x = jax.random.normal(key, (2, 4, 16, 16), dtype=jnp.float32)
    ref = jnp.maximum(x, 0.0)
    y = relu_pallas(x)
    jax.block_until_ready(y)
    assert y.shape == x.shape and y.dtype == x.dtype
    assert jnp.allclose(y, ref), "mismatch vs reference ReLU (small input)"

    # Ragged size (n % 512 != 0): exercises the bulk + tail path.
    x2 = jax.random.normal(jax.random.PRNGKey(1), (3, 5, 17, 13),
                           dtype=jnp.float32)
    y2 = relu_pallas(x2)
    jax.block_until_ready(y2)
    assert jnp.allclose(y2, jnp.maximum(x2, 0.0)), "mismatch (ragged input)"

    # Multi-block grid with a masked partial last row-block
    # (2100 rows, tile_r = 2048 for f32) -> verifies masked writes are inert.
    x3 = jax.random.normal(jax.random.PRNGKey(2), (2100, 512),
                           dtype=jnp.float32)
    y3 = relu_pallas(x3)
    jax.block_until_ready(y3)
    assert jnp.allclose(y3, jnp.maximum(x3, 0.0)), "mismatch (partial block)"

    # bf16 path: dtype-scaled tile (byte budget, not element count).
    x4 = jax.random.normal(jax.random.PRNGKey(3), (8, 64, 64),
                           dtype=jnp.bfloat16)
    y4 = relu_pallas(x4)
    jax.block_until_ready(y4)
    assert jnp.array_equal(y4, jnp.maximum(x4, jnp.zeros((), jnp.bfloat16))), \
        "mismatch (bf16 input)"

    print("KERNEL_OK")
</pallas_src>

<mosaic_0001>
module attributes {stable_mosaic.version = 11 : i64} {
  func.func @_relu_kernel(%arg0: i32, %arg1: memref<4x512xf32, #tpu.memory_space<vmem>>, %arg2: memref<4x512xf32, #tpu.memory_space<vmem>>) attributes {dimension_semantics = [#tpu.dimension_semantics<parallel>], iteration_bounds = array<i64: 1>, scalar_prefetch = 0 : i64, scratch_operands = 0 : i64, tpu.core_type = #tpu.core_type<tc>, window_params = [{transform_indices = @transform_0, window_bounds = array<i64: 4, 512>}, {transform_indices = @transform_1, window_bounds = array<i64: 4, 512>}]} {
    %c0 = arith.constant 0 : index
    %c0_0 = arith.constant 0 : index
    %0 = vector.load %arg1[%c0, %c0_0] : memref<4x512xf32, #tpu.memory_space<vmem>>, vector<4x512xf32>
    %cst = arith.constant 0.000000e+00 : f32
    %1 = vector.broadcast %cst : f32 to vector<4x512xf32>
    %2 = arith.maximumf %0, %1 : vector<4x512xf32>
    %c0_1 = arith.constant 0 : index
    %c0_2 = arith.constant 0 : index
    %3 = vector.load %arg2[%c0_1, %c0_2] : memref<4x512xf32, #tpu.memory_space<vmem>>, vector<4x512xf32>
    tpu.vector_store %arg2[%c0_1, %c0_2], %2 {strides = array<i32>} : memref<4x512xf32, #tpu.memory_space<vmem>>, vector<4x512xf32>,
    return
  }
  func.func @transform_0(%arg0: i32) -> (i32, i32) {
    %c0_i32 = arith.constant 0 : i32
    %c0_i32_0 = arith.constant 0 : i32
    return %arg0, %c0_i32 : i32, i32
  }
  func.func @transform_1(%arg0: i32) -> (i32, i32) {
    %c0_i32 = arith.constant 0 : i32
    %c0_i32_0 = arith.constant 0 : i32
    return %arg0, %c0_i32 : i32, i32
  }
}

</mosaic_0001>

<llo_original>
// kernel: tpu_custom_call.1
$region0: #{tpu_custom_call.1}
  #allocation0 [shape = 'u32[]', space=smem, size = 0x4, offset = 0x4, fixed_abs, tag = 'smem constant byte address 0x4 - core index']
  #allocation1 [shape = 'u32[72,128]{1,0:T(1,128)}', space=vmem, size = 0x9000, scoped, tag = 'internal scratch']
  %s0 = inlined_call_operand.hbm [shape: f32[4,512], index: 0, kind: input, shape index: {}]
  %s1 = inlined_call_operand.hbm [shape: f32[4,512], index: 1, kind: output, shape index: {}]
  %s2 = sld [smem:[#allocation0]]
  $region18: #{tpu_custom_call.1} parent=0
    _
  %s4 = ssub.s32 1, %s2
  %s5 = scalar_select 0, %s4, %s2
  $region1: #{tpu_custom_call.1} parent=0
    #allocation2 [shape = 'u8[8192]{0}', space=vmem, size = 0x2000, scoped, tag = 'input window, operand 0, single buffered']
    #allocation3 [shape = 's32[1]{0}', space=sflag, size = 0x4, scoped, tag = 'scoped memory for tpu_custom_call.1']
    #allocation4 [shape = 's32[1]{0}', space=sflag, size = 0x4, scoped, tag = 'scoped memory for tpu_custom_call.1']
    #allocation5 [shape = 'u8[8192]{0}', space=vmem, size = 0x2000, scoped, tag = 'output window, operand 0, single buffered']
    %6 = vsyncpa [#allocation3], 0
    %7 = vsyncpa [#allocation4], 0
    // Predicated region
    $region2: #{tpu_custom_call.1} parent=1 // pred_check
      _
    $region3: #{tpu_custom_call.1} parent=1 // pred_check_branch
      %9 = sbr.rel (0) target = $region5
    $region4: #{tpu_custom_call.1} parent=1 // pred_region
      %11 = vsyncadd [#allocation3], 0
      %s13 = sshll.u32 %s0, 4
      %s14 = int_to_ptr.hbm [resolvable:$true] %s13
      %s15 = sshll.u32 [#allocation2], 4
      %s16 = int_to_ptr.vmem [resolvable:$true] %s15
      %18 = dma.hbm_to_vmem [thread:$0]  %s14, 256, %s16, [#allocation3]
    $region5: #{tpu_custom_call.1} parent=1 // pred_fallthru
      _
    // Predicated region
    $region6: #{tpu_custom_call.1} parent=1 // pred_check
      _
    $region7: #{tpu_custom_call.1} parent=1 // pred_check_branch
      %20 = sbr.rel (0) target = $region9
    $region8: #{tpu_custom_call.1} parent=1 // pred_region
      %22 = dma.done [#allocation3], 256
    $region9: #{tpu_custom_call.1} parent=1 // pred_fallthru
      _
    %v23 = vld [vmem:[#allocation2] sm:$0xff]
    %v24 = vld [vmem:[#allocation2 + $0x8] sm:$0xff]
    %v25 = vmax.f32 %v23, 0.0
    %v26 = vmax.f32 %v24, 0.0
    %27 = vst [vmem:[#allocation5] sm:$0xff] %v25
    %28 = vst [vmem:[#allocation5 + $0x8] sm:$0xff] %v26
    // Predicated region
    $region10: #{tpu_custom_call.1} parent=1 // pred_check
      _
    $region11: #{tpu_custom_call.1} parent=1 // pred_check_branch
      %30 = sbr.rel (0) target = $region13
    $region12: #{tpu_custom_call.1} parent=1 // pred_region
      %32 = vsyncadd [#allocation4], 0
      %s34 = sshll.u32 [#allocation5], 4
      %s35 = int_to_ptr.vmem [resolvable:$true] %s34
      %s36 = sshll.u32 %s1, 4
      %s37 = int_to_ptr.hbm [resolvable:$true] %s36
      %39 = dma.vmem_to_hbm [thread:$0]  %s35, 256, %s37, [#allocation4]
    $region13: #{tpu_custom_call.1} parent=1 // pred_fallthru
      _
    // Predicated region
    $region14: #{tpu_custom_call.1} parent=1 // pred_check
      _
    $region15: #{tpu_custom_call.1} parent=1 // pred_check_branch
      %41 = sbr.rel (0) target = $region17
    $region16: #{tpu_custom_call.1} parent=1 // pred_region
      %43 = dma.done [#allocation4], 256
    $region17: #{tpu_custom_call.1} parent=1 // pred_fallthru
      _
    %44 = vsyncpa [#allocation3], 1
    %45 = vsyncpa [#allocation4], 1

</llo_original>
